<compile_context>
chip_gen: v5e
topology: v5e:2x2
jax: 0.10.0
libtpu: 0.0.40
codegen_flags: <defaults>
</compile_context>

<pallas_src>
import jax
import jax.numpy as jnp
from jax.experimental import pallas as pl
from jax.experimental.pallas import tpu as pltpu


def pose_embed_kernel(x_ref, w_ref, posb_ref, o_ref):
    # x_ref:    (bb, N, F)  block of batch elements
    # w_ref:    (F, E)      linear weight (shared across the grid)
    # posb_ref: (N, E)      positions[1:] + bias (pre-folded in the wrapper)
    # o_ref:    (bb, N, E)  output block (projection rows only, no cls row)
    bb, N, F = x_ref.shape
    E = w_ref.shape[1]

    # Contiguous merge of (bb, N) -> bb*N rows; last dim unchanged, so no
    # layout shuffle.  One tall matmul keeps the MXU fed even for small N.
    x2 = x_ref[...].reshape(bb * N, F)
    proj = jnp.dot(x2, w_ref[...], preferred_element_type=jnp.float32)  # (bb*N, E)
    out = proj.reshape(bb, N, E) + posb_ref[...][None, :, :]
    o_ref[...] = out.astype(o_ref.dtype)


def pose_embedding(x, w, b, cls_token, positions, *,
                   block_b=None, compute_dtype=None, vmem_limit_bytes=None):
    """Forward pass of PoseEmbedding.

    x:          (B, N, F)
    w:          (F, E)   linear weight, already transposed to F x E
    b:          (E,)     linear bias
    cls_token:  (E,)
    positions:  (N+1, E)
    compute_dtype: e.g. jnp.bfloat16 to halve matmul operand bytes and use the
                   bf16 MXU path (accumulation stays f32).
    Returns (B, N+1, E) float32.
    """
    B, N, F = x.shape
    E = w.shape[1]

    # Batch-independent folding, done once outside the grid loop:
    #   rows 1..N get  bias + positions[1:]
    #   row 0 (cls)    cls_token + positions[0]
    pos_b = (positions[1:].astype(jnp.float32) + b.astype(jnp.float32))      # (N, E)
    cls_row = (cls_token.astype(jnp.float32) + positions[0].astype(jnp.float32))  # (E,)

    if compute_dtype is not None:
        x_in = x.astype(compute_dtype)
        w_in = w.astype(compute_dtype)
    else:
        x_in, w_in = x, w

    # Pick block_b so each matmul LHS has a few hundred rows (bb*N >= ~256),
    # and so block_b evenly divides B.
    if block_b is None:
        block_b = max(1, min(B, -(-256 // max(N, 1))))
    block_b = min(block_b, B)
    while B % block_b:
        block_b -= 1

    grid = (B // block_b,)

    # NOTE: for production ViT shapes E (= 768/1024) is already a multiple of
    # 128, giving lane-dense unmasked stores.  For very large F/E on v7x
    # (64 MiB VMEM), pass vmem_limit_bytes explicitly or add a K (F) grid axis
    # with an f32 accumulator scratch.
    # TODO(synk): add optional K-tiling over F for configs whose (block_b,N,F)
    # + (F,E) tiles exceed the scoped VMEM limit.
    cp_kwargs = {"dimension_semantics": ("parallel",)}
    if vmem_limit_bytes is not None:
        cp_kwargs["vmem_limit_bytes"] = vmem_limit_bytes

    proj = pl.pallas_call(
        pose_embed_kernel,
        out_shape=jax.ShapeDtypeStruct((B, N, E), jnp.float32),
        grid_spec=pltpu.PrefetchScalarGridSpec(
            num_scalar_prefetch=0,
            grid=grid,
            in_specs=[
                pl.BlockSpec((block_b, N, F), lambda bi: (bi, 0, 0)),  # x slab
                pl.BlockSpec((F, E), lambda bi: (0, 0)),               # weight
                pl.BlockSpec((N, E), lambda bi: (0, 0)),               # pos[1:]+b
            ],
            out_specs=pl.BlockSpec((block_b, N, E), lambda bi: (bi, 0, 0)),
        ),
        compiler_params=pltpu.CompilerParams(**cp_kwargs),
    )(x_in, w_in, pos_b)

    # Stitch the single (batch-independent) cls row on outside the kernel.
    cls_rows = jnp.broadcast_to(cls_row.reshape(1, 1, E), (B, 1, E))
    return jnp.concatenate([cls_rows, proj], axis=1)


def pose_embedding_ref(x, w, b, cls_token, positions):
    B = x.shape[0]
    proj = jnp.einsum("bnf,fe->bne", x.astype(jnp.float32), w.astype(jnp.float32)) + b
    cls = jnp.broadcast_to(cls_token.reshape(1, 1, -1), (B, 1, w.shape[1]))
    out = jnp.concatenate([cls, proj], axis=1)
    return out + positions[None]


if __name__ == "__main__":
    # Small shapes consistent with the module's forward:
    #   batch=2, num_patches=8, in_features=16, emb_size=32
    B, N, F, E = 2, 8, 16, 32

    key = jax.random.PRNGKey(0)
    kx, kw, kb, kc, kp = jax.random.split(key, 5)

    x = jax.random.normal(kx, (B, N, F), dtype=jnp.float32)

    # Deterministic parameter init (synthetic; mimics nn.Linear + randn params).
    bound = 1.0 / (F ** 0.5)
    w = jax.random.uniform(kw, (F, E), minval=-bound, maxval=bound, dtype=jnp.float32)
    b = jax.random.uniform(kb, (E,), minval=-bound, maxval=bound, dtype=jnp.float32)
    cls_token = jax.random.normal(kc, (E,), dtype=jnp.float32)        # torch.randn(1,1,E)
    positions = jax.random.normal(kp, (N + 1, E), dtype=jnp.float32)  # torch.randn(N+1,E)

    # f32 path: exact match vs pure-JAX reference.
    out = pose_embedding(x, w, b, cls_token, positions)
    out = jax.block_until_ready(out)
    ref = pose_embedding_ref(x, w, b, cls_token, positions)
    assert out.shape == (B, N + 1, E)
    assert jnp.allclose(out, ref, atol=1e-5, rtol=1e-5), "mismatch vs pure-JAX reference (f32)"

    # bf16 MXU path: compare against a reference built from the same
    # bf16-rounded operands (accumulation is f32 in both).
    out_bf16 = pose_embedding(x, w, b, cls_token, positions, compute_dtype=jnp.bfloat16)
    out_bf16 = jax.block_until_ready(out_bf16)
    ref_bf16 = pose_embedding_ref(
        x.astype(jnp.bfloat16).astype(jnp.float32),
        w.astype(jnp.bfloat16).astype(jnp.float32),
        b, cls_token, positions)
    assert out_bf16.shape == (B, N + 1, E)
    assert jnp.allclose(out_bf16, ref_bf16, atol=1e-2, rtol=1e-2), "mismatch vs reference (bf16)"

    print("KERNEL_OK")
</pallas_src>

<mosaic_0001>
module attributes {stable_mosaic.version = 11 : i64} {
  func.func @pose_embed_kernel(%arg0: i32, %arg1: memref<2x8x16xf32, #tpu.memory_space<vmem>>, %arg2: memref<16x32xf32, #tpu.memory_space<vmem>>, %arg3: memref<8x32xf32, #tpu.memory_space<vmem>>, %arg4: memref<2x8x32xf32, #tpu.memory_space<vmem>>) attributes {dimension_semantics = [#tpu.dimension_semantics<parallel>], iteration_bounds = array<i64: 1>, scalar_prefetch = 0 : i64, scratch_operands = 0 : i64, tpu.core_type = #tpu.core_type<tc>, window_params = [{transform_indices = @transform_0, window_bounds = array<i64: 2, 8, 16>}, {pipeline_mode = #tpu.pipeline_mode<synchronous>, transform_indices = @transform_1, window_bounds = array<i64: 16, 32>}, {pipeline_mode = #tpu.pipeline_mode<synchronous>, transform_indices = @transform_2, window_bounds = array<i64: 8, 32>}, {transform_indices = @transform_3, window_bounds = array<i64: 2, 8, 32>}]} {
    %c0 = arith.constant 0 : index
    %c0_0 = arith.constant 0 : index
    %c0_1 = arith.constant 0 : index
    %0 = vector.load %arg1[%c0, %c0_0, %c0_1] : memref<2x8x16xf32, #tpu.memory_space<vmem>>, vector<2x8x16xf32>
    %1 = vector.shape_cast %0 : vector<2x8x16xf32> to vector<16x16xf32>
    %c0_2 = arith.constant 0 : index
    %c0_3 = arith.constant 0 : index
    %2 = vector.load %arg2[%c0_2, %c0_3] : memref<16x32xf32, #tpu.memory_space<vmem>>, vector<16x32xf32>
    %cst = arith.constant dense<0.000000e+00> : vector<16x32xf32>
    %3 = tpu.matmul %1, %2, %cst {dimension_numbers = #tpu.dot_dimension_numbers<[1], [0], [0], [1], [0, 0, 1, 1], [], []>} : vector<16x16xf32>, vector<16x32xf32>, vector<16x32xf32> -> vector<16x32xf32>
    %4 = vector.shape_cast %3 : vector<16x32xf32> to vector<2x8x32xf32>
    %c0_4 = arith.constant 0 : index
    %c0_5 = arith.constant 0 : index
    %5 = vector.load %arg3[%c0_4, %c0_5] : memref<8x32xf32, #tpu.memory_space<vmem>>, vector<8x32xf32>
    %6 = vector.shape_cast %5 : vector<8x32xf32> to vector<1x8x32xf32>
    %7 = vector.broadcast %6 : vector<1x8x32xf32> to vector<2x8x32xf32>
    %8 = arith.addf %4, %7 : vector<2x8x32xf32>
    %c0_6 = arith.constant 0 : index
    %c0_7 = arith.constant 0 : index
    %c0_8 = arith.constant 0 : index
    %9 = vector.load %arg4[%c0_6, %c0_7, %c0_8] : memref<2x8x32xf32, #tpu.memory_space<vmem>>, vector<2x8x32xf32>
    tpu.vector_store %arg4[%c0_6, %c0_7, %c0_8], %8 {strides = array<i32>} : memref<2x8x32xf32, #tpu.memory_space<vmem>>, vector<2x8x32xf32>,
    return
  }
  func.func @transform_0(%arg0: i32) -> (i32, i32, i32) {
    %c0_i32 = arith.constant 0 : i32
    %c0_i32_0 = arith.constant 0 : i32
    %c0_i32_1 = arith.constant 0 : i32
    return %arg0, %c0_i32, %c0_i32_0 : i32, i32, i32
  }
  func.func @transform_1(%arg0: i32) -> (i32, i32) {
    %c0_i32 = arith.constant 0 : i32
    %c0_i32_0 = arith.constant 0 : i32
    %c0_i32_1 = arith.constant 0 : i32
    return %c0_i32, %c0_i32_0 : i32, i32
  }
  func.func @transform_2(%arg0: i32) -> (i32, i32) {
    %c0_i32 = arith.constant 0 : i32
    %c0_i32_0 = arith.constant 0 : i32
    %c0_i32_1 = arith.constant 0 : i32
    return %c0_i32, %c0_i32_0 : i32, i32
  }
  func.func @transform_3(%arg0: i32) -> (i32, i32, i32) {
    %c0_i32 = arith.constant 0 : i32
    %c0_i32_0 = arith.constant 0 : i32
    %c0_i32_1 = arith.constant 0 : i32
    return %arg0, %c0_i32, %c0_i32_0 : i32, i32, i32
  }
}

</mosaic_0001>

<llo_original>
// kernel: tpu_custom_call.1
$region0: #{tpu_custom_call.1}
  #allocation0 [shape = 'u32[]', space=smem, size = 0x4, offset = 0x4, fixed_abs, tag = 'smem constant byte address 0x4 - core index']
  #allocation1 [shape = 'u32[72,128]{1,0:T(1,128)}', space=vmem, size = 0x9000, scoped, tag = 'internal scratch']
  %s0 = inlined_call_operand.hbm [shape: f32[2,8,16], index: 0, kind: input, shape index: {}]
  %s1 = inlined_call_operand.hbm [shape: f32[16,32], index: 1, kind: input, shape index: {}]
  %s2 = inlined_call_operand.hbm [shape: f32[8,32], index: 2, kind: input, shape index: {}]
  %s3 = inlined_call_operand.hbm [shape: f32[2,8,32], index: 3, kind: output, shape index: {}]
  %s4 = sld [smem:[#allocation0]]
  $region34: #{tpu_custom_call.1} parent=0
    _
  %s6 = ssub.s32 1, %s4
  %s7 = scalar_select 0, %s6, %s4
  $region1: #{tpu_custom_call.1} parent=0
    #allocation2 [shape = 'u8[8192]{0}', space=vmem, size = 0x2000, scoped, tag = 'input window, operand 0, single buffered']
    #allocation3 [shape = 's32[1]{0}', space=sflag, size = 0x4, scoped, tag = 'scoped memory for tpu_custom_call.1']
    #allocation4 [shape = 's32[1]{0}', space=sflag, size = 0x4, scoped, tag = 'scoped memory for tpu_custom_call.1']
    #allocation5 [shape = 'u8[8192]{0}', space=vmem, size = 0x2000, scoped, tag = 'input window, operand 1, single buffered']
    #allocation6 [shape = 's32[1]{0}', space=sflag, size = 0x4, scoped, tag = 'scoped memory for tpu_custom_call.1']
    #allocation7 [shape = 'u8[4096]{0}', space=vmem, size = 0x1000, scoped, tag = 'input window, operand 2, single buffered']
    #allocation8 [shape = 'u8[8192]{0}', space=vmem, size = 0x2000, scoped, tag = 'output window, operand 0, single buffered']
    %8 = vsyncpa [#allocation3], 0
    %9 = vsyncpa [#allocation6], 0
    %10 = vsyncpa [#allocation4], 0
    // Predicated region
    $region2: #{tpu_custom_call.1} parent=1 // pred_check
      _
    $region3: #{tpu_custom_call.1} parent=1 // pred_check_branch
      %12 = sbr.rel (0) target = $region5
    $region4: #{tpu_custom_call.1} parent=1 // pred_region
      %14 = vsyncadd [#allocation3], 0
      %s15 = sshll.u32 %s0, 4
      %s16 = int_to_ptr.hbm [resolvable:$true] %s15
      %s17 = sshll.u32 [#allocation2], 4
      %s18 = int_to_ptr.vmem [resolvable:$true] %s17
      %23 = dma.hbm_to_vmem [thread:$0]  %s16, 256, %s18, [#allocation3], 128, 128, 8
    $region5: #{tpu_custom_call.1} parent=1 // pred_fallthru
      _
    // Predicated region
    $region6: #{tpu_custom_call.1} parent=1 // pred_check
      _
    $region7: #{tpu_custom_call.1} parent=1 // pred_check_branch
      %25 = sbr.rel (0) target = $region9
    $region8: #{tpu_custom_call.1} parent=1 // pred_region
      %27 = vsyncadd [#allocation6], 0
      %s28 = sshll.u32 %s1, 4
      %s29 = int_to_ptr.hbm [resolvable:$true] %s28
      %s30 = sshll.u32 [#allocation5], 4
      %s31 = int_to_ptr.vmem [resolvable:$true] %s30
      %36 = dma.hbm_to_vmem [thread:$0]  %s29, 256, %s31, [#allocation6], 128, 128, 8
    $region9: #{tpu_custom_call.1} parent=1 // pred_fallthru
      _
    // Predicated region
    $region10: #{tpu_custom_call.1} parent=1 // pred_check
      _
    $region11: #{tpu_custom_call.1} parent=1 // pred_check_branch
      %38 = sbr.rel (0) target = $region13
    $region12: #{tpu_custom_call.1} parent=1 // pred_region
      %40 = vsyncadd [#allocation6], 0
      %s42 = sshll.u32 %s2, 4
      %s43 = int_to_ptr.hbm [resolvable:$true] %s42
      %s44 = sshll.u32 [#allocation7], 4
      %s45 = int_to_ptr.vmem [resolvable:$true] %s44
      %47 = dma.hbm_to_vmem [thread:$0]  %s43, 128, %s45, [#allocation6]
    $region13: #{tpu_custom_call.1} parent=1 // pred_fallthru
      _
    // Predicated region
    $region14: #{tpu_custom_call.1} parent=1 // pred_check
      _
    $region15: #{tpu_custom_call.1} parent=1 // pred_check_branch
      %49 = sbr.rel (0) target = $region17
    $region16: #{tpu_custom_call.1} parent=1 // pred_region
      %51 = dma.done [#allocation3], 256
    $region17: #{tpu_custom_call.1} parent=1 // pred_fallthru
      _
    // Predicated region
    $region18: #{tpu_custom_call.1} parent=1 // pred_check
      _
    $region19: #{tpu_custom_call.1} parent=1 // pred_check_branch
      %53 = sbr.rel (0) target = $region21
    $region20: #{tpu_custom_call.1} parent=1 // pred_region
      %55 = dma.done [#allocation6], 256
    $region21: #{tpu_custom_call.1} parent=1 // pred_fallthru
      _
    // Predicated region
    $region22: #{tpu_custom_call.1} parent=1 // pred_check
      _
    $region23: #{tpu_custom_call.1} parent=1 // pred_check_branch
      %57 = sbr.rel (0) target = $region25
    $region24: #{tpu_custom_call.1} parent=1 // pred_region
      %59 = dma.done [#allocation6], 128
    $region25: #{tpu_custom_call.1} parent=1 // pred_fallthru
      _
    %v60 = vld [vmem:[#allocation2] sm:$0xff]
    %v61 = vld [vmem:[#allocation2 + $0x8] sm:$0xff]
    %v62 = vld [vmem:[#allocation5] sm:$0xff]
    %v63 = vld [vmem:[#allocation5 + $0x8] sm:$0xff]
    %vm64 = vcmask 130048
    %v66 = vsel %vm64, %v60, 0
    %v69 = vsel %vm64, %v61, 0
    %71 = vmatpush.msra.mxu0 0.0
    %72 = vmatpush.msra.mxu0 0.0
    %73 = vmatpush.msra.mxu0 0.0
    %74 = vmatpush.msra.mxu0 0.0
    %75 = vmatpush.msra.mxu0 0.0
    %76 = vmatpush.msra.mxu0 0.0
    %77 = vmatpush.msra.mxu0 0.0
    %78 = vmatpush.msra.mxu0 0.0
    %79 = vmatpush.msra.mxu0 0.0
    %80 = vmatpush.msra.mxu0 0.0
    %81 = vmatpush.msra.mxu0 0.0
    %82 = vmatpush.msra.mxu0 0.0
    %83 = vmatpush.msra.mxu0 0.0
    %84 = vmatpush.msra.mxu0 0.0
    %85 = vmatpush.msra.mxu0 %v63
    %86 = vmatpush.msra.mxu0 %v62
    %87 = vmatmul.f32.gmra.mxu0 %v66
    %v88 = vpop.f32.mrf.mxu0
    %v89 = vadd.f32 0.0, %v88
    %90 = vmatmul.f32.gmra.mxu0 %v69
    %v91 = vpop.f32.mrf.mxu0
    %v92 = vadd.f32 0.0, %v91
    %93 = vdwg.mxu0
    %v94 = vld [vmem:[#allocation7] sm:$0xff]
    %v95 = vadd.f32 %v89, %v94
    %v96 = vadd.f32 %v92, %v94
    %vm97 = vcmask 261120
    %98 = vst.msk [vmem:[#allocation8] sm:$0xff] %vm97, %v95
    %99 = vst.msk [vmem:[#allocation8 + $0x8] sm:$0xff] %vm97, %v96
    // Predicated region
    $region26: #{tpu_custom_call.1} parent=1 // pred_check
      _
    $region27: #{tpu_custom_call.1} parent=1 // pred_check_branch
      %101 = sbr.rel (0) target = $region29
    $region28: #{tpu_custom_call.1} parent=1 // pred_region
      %103 = vsyncadd [#allocation4], 0
      %s104 = sshll.u32 [#allocation8], 4
      %s105 = int_to_ptr.vmem [resolvable:$true] %s104
      %s106 = sshll.u32 %s3, 4
      %s107 = int_to_ptr.hbm [resolvable:$true] %s106
      %112 = dma.vmem_to_hbm [thread:$0]  %s105, 256, %s107, [#allocation4], 128, 128, 8
    $region29: #{tpu_custom_call.1} parent=1 // pred_fallthru
      _
    // Predicated region
    $region30: #{tpu_custom_call.1} parent=1 // pred_check
      _
    $region31: #{tpu_custom_call.1} parent=1 // pred_check_branch
      %114 = sbr.rel (0) target = $region33
    $region32: #{tpu_custom_call.1} parent=1 // pred_region
      %116 = dma.done [#allocation4], 256
    $region33: #{tpu_custom_call.1} parent=1 // pred_fallthru
      _
    %117 = vsyncpa [#allocation3], 1
    %118 = vsyncpa [#allocation6], 1
    %119 = vsyncpa [#allocation4], 1

</llo_original>
